<compile_context>
chip_gen: v5e
topology: v5e:2x2
jax: 0.10.0
libtpu: 0.0.40
codegen_flags: <defaults>
</compile_context>

<pallas_src>
import functools

import jax
import jax.numpy as jnp
from jax import lax
from jax.experimental import pallas as pl
from jax.experimental.pallas import tpu as pltpu


def _round_up(x, m):
    return ((x + m - 1) // m) * m


def _sublane_tile(dtype):
    # f32 sublane tile is 8; sub-32-bit dtypes pack along sublanes (bf16 -> 16).
    return 8 * (4 // jnp.dtype(dtype).itemsize)


def _physical_vmem_cap():
    """~3/4 of physical VMEM (48 MiB on v7x, 96 MiB on v5e/v6e)."""
    try:
        info = pltpu.get_tpu_info()
        cap = getattr(info, "vmem_capacity_bytes", None)
        if cap:
            return int(cap) * 3 // 4
    except Exception:
        pass
    return 48 << 20  # conservative fallback: safe under v7x's 64 MiB physical


def _const_spec(shape):
    """BlockSpec for a grid-invariant operand; single-buffered to save VMEM."""
    index_map = lambda g: (0,) * len(shape)
    try:
        return pl.BlockSpec(shape, index_map, pipeline_mode=pl.Buffered(1))
    except (TypeError, AttributeError):
        # Older BlockSpec without pipeline_mode: fall back to default buffering.
        return pl.BlockSpec(shape, index_map)


def _encoder_block_kernel(x_ref, w1_ref, b1_ref, w2_ref, b2_ref, out_ref, *,
                          img_w, out_flat, cin_pad, compute_dtype):
    # x_ref : (Bt, Cin,  H*W)   f32, pixels on the lane axis
    # w1_ref: (Ch_p,  9*Cin_p)  compute_dtype, column order (dy, dx, cin_p)
    # b1_ref: (Ch_p, 1)         f32
    # w2_ref: (Cout_p, 9*Ch_p)  compute_dtype
    # b2_ref: (Cout_p, 1)       f32
    # out_ref:(Bt, Cout, (H-4)*W)  bottom garbage rows dropped in-kernel;
    #         the column crop (to W-4) is done by the wrapper / consumer.
    bt, _, flat_len = x_ref.shape
    cout = out_ref.shape[1]
    total = bt * flat_len
    shifts = [dy * img_w + dx for dy in range(3) for dx in range(3)]

    w1 = w1_ref[...]
    w2 = w2_ref[...]
    b1 = b1_ref[...].astype(jnp.float32)
    b2 = b2_ref[...].astype(jnp.float32)

    # Load each image once (f32 kept for the exact residual), zero-pad the
    # channel dim to the compute-dtype sublane tile, cast, and lane-concat the
    # Bt images so each conv is a single long-N MXU matmul per grid step.
    pad_rows = (jnp.zeros((cin_pad, flat_len), jnp.float32)
                if cin_pad else None)                     # hoisted (no CSE in loops)
    ximgs, imgs_c = [], []
    for b in range(bt):
        xi = x_ref[b]                                     # (Cin, L) f32
        ximgs.append(xi)
        xp = jnp.concatenate([xi, pad_rows], axis=0) if cin_pad else xi
        imgs_c.append(xp.astype(compute_dtype))           # (Cin_p, L)
    xcat = imgs_c[0] if bt == 1 else jnp.concatenate(imgs_c, axis=1)

    def taps_of(a):
        # tap_s[c, p] == a[c, (p + s) mod total]; rolls that cross an image
        # boundary (or wrap around) only pollute pixels outside the VALID conv
        # region, which are never stored / are cropped by the wrapper.
        return [a if s == 0 else pltpu.roll(a, total - s, axis=1)
                for s in shifts]

    # ---- conv1 + bias + ReLU: taps folded into K = 9*Cin_p, f32 accumulate ----
    patches1 = jnp.concatenate(taps_of(xcat), axis=0)     # (9*Cin_p, Bt*L)
    h1 = jnp.maximum(
        jnp.dot(w1, patches1, preferred_element_type=jnp.float32) + b1, 0.0)

    # ---- conv2 + bias + ReLU (taps in compute dtype; padded channels are 0) ----
    h1c = h1.astype(compute_dtype)                        # (Ch_p, Bt*L)
    patches2 = jnp.concatenate(taps_of(h1c), axis=0)      # (9*Ch_p, Bt*L)
    h2 = jnp.maximum(
        jnp.dot(w2, patches2, preferred_element_type=jnp.float32) + b2, 0.0)

    # ---- residual (exact f32): centre crop == shift of the input by 2*W+2 ----
    r0 = 2 * img_w + 2
    for b in range(bt):
        main = h2[:cout, b * flat_len: b * flat_len + out_flat]
        res = ximgs[b][:, r0: r0 + out_flat]              # f32, exact
        out_ref[b] = (main + res).astype(out_ref.dtype)


@functools.partial(jax.jit, static_argnames=("compute_dtype",))
def scalogram_encoder_block(x_nchw, w1_oihw, b1, w2_oihw, b2, *,
                            compute_dtype=jnp.bfloat16):
    """Forward of ScalogramEncoderBlock (default config).

    x_nchw: (N, Cin, H, W) f32; returns (N, Cout, H-4, W-4) f32.
    compute_dtype=jnp.float32 is the exact escape hatch (bf16 taps otherwise).
    """
    N, Cin, H, W = x_nchw.shape
    Ch, Cin_w, kh1, kw1 = w1_oihw.shape
    Cout, Ch_w, kh2, kw2 = w2_oihw.shape
    assert (kh1, kw1) == (3, 3) and (kh2, kw2) == (3, 3), "3x3 kernels only"
    assert Cin_w == Cin and Ch_w == Ch
    assert H > 4 and W > 4, "two VALID 3x3 convs need H, W > 4"
    if Cin != Cout:
        # TODO(synk): 1x1 residual projection branch (in_channels != out_channels).
        raise NotImplementedError("identity residual path requires Cin == Cout")

    H2, W2 = H - 4, W - 4
    L = H * W
    out_flat = H2 * W                  # stored per image (rows cropped in-kernel)
    cs = jnp.dtype(compute_dtype).itemsize
    act_bytes = jnp.dtype(x_nchw.dtype).itemsize
    tile = _sublane_tile(compute_dtype)
    cin_p, ch_p, cout_p = (_round_up(c, tile) for c in (Cin, Ch, Cout))

    # ---- constants: zero-padded, K-folded weights / biases (tiny) ----
    # Column order (dy, dx, cin_p) matches the in-kernel tap concat order.
    w1_pad = jnp.zeros((ch_p, cin_p, 3, 3), w1_oihw.dtype).at[:Ch, :Cin].set(w1_oihw)
    w2_pad = jnp.zeros((cout_p, ch_p, 3, 3), w2_oihw.dtype).at[:Cout, :Ch].set(w2_oihw)
    w1f = jnp.transpose(w1_pad, (0, 2, 3, 1)).reshape(ch_p, 9 * cin_p).astype(compute_dtype)
    w2f = jnp.transpose(w2_pad, (0, 2, 3, 1)).reshape(cout_p, 9 * ch_p).astype(compute_dtype)
    b1c = jnp.zeros((ch_p, 1), jnp.float32).at[:Ch, 0].set(b1.astype(jnp.float32))
    b2c = jnp.zeros((cout_p, 1), jnp.float32).at[:Cout, 0].set(b2.astype(jnp.float32))

    # Metadata-only reshape: pixels on the (lane-dense) minor axis.
    x3 = x_nchw.reshape(N, Cin, L)

    # ---- VMEM budget & batch-block size ----
    weight_bytes = (w1f.size + w2f.size) * cs + (b1c.size + b2c.size) * 4
    # Per-image kernel values (taps + patches in compute dtype, f32 intermediates).
    per_img_vals = L * (cs * 19 * (cin_p + ch_p)
                        + 4 * (cin_p + ch_p + 2 * cout_p))
    # Per-image pipelined blocks (input / output double-buffered by the pipeline).
    per_img_blocks = 2 * (Cin * L + Cout * out_flat) * act_bytes
    per_img = per_img_vals + per_img_blocks

    vmem_cap = _physical_vmem_cap()
    budget = max(vmem_cap - weight_bytes - (4 << 20), per_img)
    bt_cap = max(1, int(budget // per_img))
    if N >= 2:
        bt_cap = min(bt_cap, N // 2)   # keep >= 2 grid steps for v7x megacore
    bt = 1
    for d in range(min(bt_cap, N), 0, -1):
        if N % d == 0:
            bt = d
            break
    grid = (N // bt,)

    vmem_limit = int(min(vmem_cap,
                         max(16 << 20, bt * per_img + weight_bytes + (2 << 20))))

    flops = 2 * 9 * (cin_p * ch_p + ch_p * cout_p) * N * L
    bytes_accessed = (N * Cin * L + N * Cout * out_flat) * act_bytes + weight_bytes

    kernel = functools.partial(_encoder_block_kernel, img_w=W, out_flat=out_flat,
                               cin_pad=cin_p - Cin, compute_dtype=compute_dtype)

    out = pl.pallas_call(
        kernel,
        out_shape=jax.ShapeDtypeStruct((N, Cout, out_flat), x_nchw.dtype),
        grid_spec=pltpu.PrefetchScalarGridSpec(
            num_scalar_prefetch=0,
            grid=grid,
            in_specs=[
                pl.BlockSpec((bt, Cin, L), lambda g: (g, 0, 0)),
                _const_spec((ch_p, 9 * cin_p)),
                _const_spec((ch_p, 1)),
                _const_spec((cout_p, 9 * ch_p)),
                _const_spec((cout_p, 1)),
            ],
            out_specs=pl.BlockSpec((bt, Cout, out_flat), lambda g: (g, 0, 0)),
        ),
        compiler_params=pltpu.CompilerParams(
            dimension_semantics=("parallel",),        # megacore split on v7x
            vmem_limit_bytes=vmem_limit),
        cost_estimate=pl.CostEstimate(flops=flops, transcendentals=0,
                                      bytes_accessed=bytes_accessed),
    )(x3, w1f, b1c, w2f, b2c)

    # Only the column crop remains (garbage rows were never written).
    # TODO(synk): fuse this W2 crop into the consumer to drop the last HBM pass.
    return out.reshape(N, Cout, H2, W)[:, :, :, :W2]


def _reference_forward(x_nchw, w1_oihw, b1, w2_oihw, b2):
    """Pure-JAX reference mirroring the PyTorch forward (default config)."""
    dn = ("NCHW", "OIHW", "NCHW")
    h = lax.conv_general_dilated(x_nchw, w1_oihw, (1, 1), "VALID",
                                 dimension_numbers=dn)
    h = jnp.maximum(h + b1[None, :, None, None], 0.0)
    h = lax.conv_general_dilated(h, w2_oihw, (1, 1), "VALID",
                                 dimension_numbers=dn)
    h = jnp.maximum(h + b2[None, :, None, None], 0.0)
    # residual crop: o_h = o_w = 2.5 -> res[:, :, 2:H-2, 2:W-2]
    res = x_nchw[:, :, 2:-2, 2:-2]
    return h + res


if __name__ == "__main__":
    # Small shapes consistent with the module's default config (in == hidden ==
    # out channels so the residual path is identity + crop).  N=4 exercises the
    # batch-blocked grid (Bt=2, grid=(2,)).
    N, C, H, W = 4, 8, 16, 16

    key = jax.random.PRNGKey(0)
    k_x, k_w1, k_b1, k_w2, k_b2 = jax.random.split(key, 5)
    x = jax.random.normal(k_x, (N, C, H, W), dtype=jnp.float32)
    w1 = jax.random.normal(k_w1, (C, C, 3, 3), dtype=jnp.float32) * 0.1
    b1 = jax.random.normal(k_b1, (C,), dtype=jnp.float32) * 0.1
    w2 = jax.random.normal(k_w2, (C, C, 3, 3), dtype=jnp.float32) * 0.1
    b2 = jax.random.normal(k_b2, (C,), dtype=jnp.float32) * 0.1

    ref = _reference_forward(x, w1, b1, w2, b2)

    # Exact path: f32 taps / matmul inputs -> tight tolerance.
    out_f32 = jax.block_until_ready(
        scalogram_encoder_block(x, w1, b1, w2, b2, compute_dtype=jnp.float32))
    assert out_f32.shape == (N, C, H - 4, W - 4), out_f32.shape
    assert jnp.allclose(out_f32, ref, atol=1e-4, rtol=1e-4), (
        float(jnp.max(jnp.abs(out_f32 - ref))))

    # Default fast path: bf16 taps / MXU inputs, f32 accumulation / bias /
    # ReLU / residual -> loose tolerance.
    out_bf16 = jax.block_until_ready(scalogram_encoder_block(x, w1, b1, w2, b2))
    assert out_bf16.shape == (N, C, H - 4, W - 4), out_bf16.shape
    assert jnp.allclose(out_bf16, ref, atol=1e-1, rtol=1e-1), (
        float(jnp.max(jnp.abs(out_bf16 - ref))))

    print("KERNEL_OK")
</pallas_src>

<mosaic_0001>
module attributes {stable_mosaic.version = 11 : i64} {
  func.func @_encoder_block_kernel(%arg0: i32, %arg1: memref<2x8x256xf32, #tpu.memory_space<vmem>>, %arg2: memref<8x72xf32, #tpu.memory_space<vmem>>, %arg3: memref<8x1xf32, #tpu.memory_space<vmem>>, %arg4: memref<8x72xf32, #tpu.memory_space<vmem>>, %arg5: memref<8x1xf32, #tpu.memory_space<vmem>>, %arg6: memref<2x8x192xf32, #tpu.memory_space<vmem>>) attributes {dimension_semantics = [#tpu.dimension_semantics<parallel>], iteration_bounds = array<i64: 2>, scalar_prefetch = 0 : i64, scratch_operands = 0 : i64, tpu.core_type = #tpu.core_type<tc>, window_params = [{transform_indices = @transform_0, window_bounds = array<i64: 2, 8, 256>}, {pipeline_mode = #tpu.pipeline_mode<synchronous>, transform_indices = @transform_1, window_bounds = array<i64: 8, 72>}, {pipeline_mode = #tpu.pipeline_mode<synchronous>, transform_indices = @transform_2, window_bounds = array<i64: 8, 1>}, {pipeline_mode = #tpu.pipeline_mode<synchronous>, transform_indices = @transform_3, window_bounds = array<i64: 8, 72>}, {pipeline_mode = #tpu.pipeline_mode<synchronous>, transform_indices = @transform_4, window_bounds = array<i64: 8, 1>}, {transform_indices = @transform_5, window_bounds = array<i64: 2, 8, 192>}]} {
    %c0 = arith.constant 0 : index
    %c0_0 = arith.constant 0 : index
    %0 = vector.load %arg2[%c0, %c0_0] : memref<8x72xf32, #tpu.memory_space<vmem>>, vector<8x72xf32>
    %c0_1 = arith.constant 0 : index
    %c0_2 = arith.constant 0 : index
    %1 = vector.load %arg4[%c0_1, %c0_2] : memref<8x72xf32, #tpu.memory_space<vmem>>, vector<8x72xf32>
    %c0_3 = arith.constant 0 : index
    %c0_4 = arith.constant 0 : index
    %2 = vector.load %arg3[%c0_3, %c0_4] : memref<8x1xf32, #tpu.memory_space<vmem>>, vector<8x1xf32>
    %c0_5 = arith.constant 0 : index
    %c0_6 = arith.constant 0 : index
    %3 = vector.load %arg5[%c0_5, %c0_6] : memref<8x1xf32, #tpu.memory_space<vmem>>, vector<8x1xf32>
    %c0_7 = arith.constant 0 : index
    %c0_8 = arith.constant 0 : index
    %c0_9 = arith.constant 0 : index
    %4 = vector.load %arg1[%c0_7, %c0_8, %c0_9] : memref<2x8x256xf32, #tpu.memory_space<vmem>>, vector<1x8x256xf32>
    %5 = vector.shape_cast %4 : vector<1x8x256xf32> to vector<8x256xf32>
    %c1 = arith.constant 1 : index
    %c0_10 = arith.constant 0 : index
    %c0_11 = arith.constant 0 : index
    %6 = vector.load %arg1[%c1, %c0_10, %c0_11] : memref<2x8x256xf32, #tpu.memory_space<vmem>>, vector<1x8x256xf32>
    %7 = vector.shape_cast %6 : vector<1x8x256xf32> to vector<8x256xf32>
    %8 = tpu.concatenate %5, %7 in 1 : vector<8x256xf32>, vector<8x256xf32> -> vector<8x512xf32>
    %c511_i32 = arith.constant 511 : i32
    %9 = tpu.dynamic_rotate %8 by %c511_i32 dim 1 : vector<8x512xf32>, i32 -> vector<8x512xf32>
    %c510_i32 = arith.constant 510 : i32
    %10 = tpu.dynamic_rotate %8 by %c510_i32 dim 1 : vector<8x512xf32>, i32 -> vector<8x512xf32>
    %c496_i32 = arith.constant 496 : i32
    %11 = tpu.dynamic_rotate %8 by %c496_i32 dim 1 : vector<8x512xf32>, i32 -> vector<8x512xf32>
    %c495_i32 = arith.constant 495 : i32
    %12 = tpu.dynamic_rotate %8 by %c495_i32 dim 1 : vector<8x512xf32>, i32 -> vector<8x512xf32>
    %c494_i32 = arith.constant 494 : i32
    %13 = tpu.dynamic_rotate %8 by %c494_i32 dim 1 : vector<8x512xf32>, i32 -> vector<8x512xf32>
    %c480_i32 = arith.constant 480 : i32
    %14 = tpu.dynamic_rotate %8 by %c480_i32 dim 1 : vector<8x512xf32>, i32 -> vector<8x512xf32>
    %c479_i32 = arith.constant 479 : i32
    %15 = tpu.dynamic_rotate %8 by %c479_i32 dim 1 : vector<8x512xf32>, i32 -> vector<8x512xf32>
    %c478_i32 = arith.constant 478 : i32
    %16 = tpu.dynamic_rotate %8 by %c478_i32 dim 1 : vector<8x512xf32>, i32 -> vector<8x512xf32>
    %17 = tpu.concatenate %8, %9, %10, %11, %12, %13, %14, %15, %16 in 0 : vector<8x512xf32>, vector<8x512xf32>, vector<8x512xf32>, vector<8x512xf32>, vector<8x512xf32>, vector<8x512xf32>, vector<8x512xf32>, vector<8x512xf32>, vector<8x512xf32> -> vector<72x512xf32>
    %cst = arith.constant dense<0.000000e+00> : vector<8x512xf32>
    %18 = tpu.matmul %0, %17, %cst {dimension_numbers = #tpu.dot_dimension_numbers<[1], [0], [0], [1], [0, 0, 1, 1], [], []>} : vector<8x72xf32>, vector<72x512xf32>, vector<8x512xf32> -> vector<8x512xf32>
    %19 = vector.broadcast %2 : vector<8x1xf32> to vector<8x512xf32>
    %20 = arith.addf %18, %19 : vector<8x512xf32>
    %cst_12 = arith.constant 0.000000e+00 : f32
    %21 = vector.broadcast %cst_12 : f32 to vector<8x512xf32>
    %22 = arith.maximumf %20, %21 : vector<8x512xf32>
    %c511_i32_13 = arith.constant 511 : i32
    %23 = tpu.dynamic_rotate %22 by %c511_i32_13 dim 1 : vector<8x512xf32>, i32 -> vector<8x512xf32>
    %c510_i32_14 = arith.constant 510 : i32
    %24 = tpu.dynamic_rotate %22 by %c510_i32_14 dim 1 : vector<8x512xf32>, i32 -> vector<8x512xf32>
    %c496_i32_15 = arith.constant 496 : i32
    %25 = tpu.dynamic_rotate %22 by %c496_i32_15 dim 1 : vector<8x512xf32>, i32 -> vector<8x512xf32>
    %c495_i32_16 = arith.constant 495 : i32
    %26 = tpu.dynamic_rotate %22 by %c495_i32_16 dim 1 : vector<8x512xf32>, i32 -> vector<8x512xf32>
    %c494_i32_17 = arith.constant 494 : i32
    %27 = tpu.dynamic_rotate %22 by %c494_i32_17 dim 1 : vector<8x512xf32>, i32 -> vector<8x512xf32>
    %c480_i32_18 = arith.constant 480 : i32
    %28 = tpu.dynamic_rotate %22 by %c480_i32_18 dim 1 : vector<8x512xf32>, i32 -> vector<8x512xf32>
    %c479_i32_19 = arith.constant 479 : i32
    %29 = tpu.dynamic_rotate %22 by %c479_i32_19 dim 1 : vector<8x512xf32>, i32 -> vector<8x512xf32>
    %c478_i32_20 = arith.constant 478 : i32
    %30 = tpu.dynamic_rotate %22 by %c478_i32_20 dim 1 : vector<8x512xf32>, i32 -> vector<8x512xf32>
    %31 = tpu.concatenate %22, %23, %24, %25, %26, %27, %28, %29, %30 in 0 : vector<8x512xf32>, vector<8x512xf32>, vector<8x512xf32>, vector<8x512xf32>, vector<8x512xf32>, vector<8x512xf32>, vector<8x512xf32>, vector<8x512xf32>, vector<8x512xf32> -> vector<72x512xf32>
    %cst_21 = arith.constant dense<0.000000e+00> : vector<8x512xf32>
    %32 = tpu.matmul %1, %31, %cst_21 {dimension_numbers = #tpu.dot_dimension_numbers<[1], [0], [0], [1], [0, 0, 1, 1], [], []>} : vector<8x72xf32>, vector<72x512xf32>, vector<8x512xf32> -> vector<8x512xf32>
    %33 = vector.broadcast %3 : vector<8x1xf32> to vector<8x512xf32>
    %34 = arith.addf %32, %33 : vector<8x512xf32>
    %cst_22 = arith.constant 0.000000e+00 : f32
    %35 = vector.broadcast %cst_22 : f32 to vector<8x512xf32>
    %36 = arith.maximumf %34, %35 : vector<8x512xf32>
    %37 = vector.extract_strided_slice %36 {offsets = [0, 0], sizes = [8, 192], strides = [1, 1]} : vector<8x512xf32> to vector<8x192xf32>
    %38 = vector.extract_strided_slice %5 {offsets = [0, 34], sizes = [8, 192], strides = [1, 1]} : vector<8x256xf32> to vector<8x192xf32>
    %39 = arith.addf %37, %38 : vector<8x192xf32>
    %c0_23 = arith.constant 0 : index
    %c0_24 = arith.constant 0 : index
    %c0_25 = arith.constant 0 : index
    %40 = vector.load %arg6[%c0_23, %c0_24, %c0_25] : memref<2x8x192xf32, #tpu.memory_space<vmem>>, vector<1x8x192xf32>
    %41 = vector.shape_cast %40 : vector<1x8x192xf32> to vector<8x192xf32>
    %42 = vector.shape_cast %39 : vector<8x192xf32> to vector<1x8x192xf32>
    tpu.vector_store %arg6[%c0_23, %c0_24, %c0_25], %42 {strides = array<i32>} : memref<2x8x192xf32, #tpu.memory_space<vmem>>, vector<1x8x192xf32>,
    %43 = vector.extract_strided_slice %36 {offsets = [0, 256], sizes = [8, 192], strides = [1, 1]} : vector<8x512xf32> to vector<8x192xf32>
    %44 = vector.extract_strided_slice %7 {offsets = [0, 34], sizes = [8, 192], strides = [1, 1]} : vector<8x256xf32> to vector<8x192xf32>
    %45 = arith.addf %43, %44 : vector<8x192xf32>
    %c1_26 = arith.constant 1 : index
    %c0_27 = arith.constant 0 : index
    %c0_28 = arith.constant 0 : index
    %46 = vector.load %arg6[%c1_26, %c0_27, %c0_28] : memref<2x8x192xf32, #tpu.memory_space<vmem>>, vector<1x8x192xf32>
    %47 = vector.shape_cast %46 : vector<1x8x192xf32> to vector<8x192xf32>
    %48 = vector.shape_cast %45 : vector<8x192xf32> to vector<1x8x192xf32>
    tpu.vector_store %arg6[%c1_26, %c0_27, %c0_28], %48 {strides = array<i32>} : memref<2x8x192xf32, #tpu.memory_space<vmem>>, vector<1x8x192xf32>,
    return
  }
  func.func @transform_0(%arg0: i32) -> (i32, i32, i32) {
    %c0_i32 = arith.constant 0 : i32
    %c0_i32_0 = arith.constant 0 : i32
    %c0_i32_1 = arith.constant 0 : i32
    return %arg0, %c0_i32, %c0_i32_0 : i32, i32, i32
  }
  func.func @transform_1(%arg0: i32) -> (i32, i32) {
    %c0_i32 = arith.constant 0 : i32
    %c0_i32_0 = arith.constant 0 : i32
    %c0_i32_1 = arith.constant 0 : i32
    return %c0_i32, %c0_i32_0 : i32, i32
  }
  func.func @transform_2(%arg0: i32) -> (i32, i32) {
    %c0_i32 = arith.constant 0 : i32
    %c0_i32_0 = arith.constant 0 : i32
    %c0_i32_1 = arith.constant 0 : i32
    return %c0_i32, %c0_i32_0 : i32, i32
  }
  func.func @transform_3(%arg0: i32) -> (i32, i32) {
    %c0_i32 = arith.constant 0 : i32
    %c0_i32_0 = arith.constant 0 : i32
    %c0_i32_1 = arith.constant 0 : i32
    return %c0_i32, %c0_i32_0 : i32, i32
  }
  func.func @transform_4(%arg0: i32) -> (i32, i32) {
    %c0_i32 = arith.constant 0 : i32
    %c0_i32_0 = arith.constant 0 : i32
    %c0_i32_1 = arith.constant 0 : i32
    return %c0_i32, %c0_i32_0 : i32, i32
  }
  func.func @transform_5(%arg0: i32) -> (i32, i32, i32) {
    %c0_i32 = arith.constant 0 : i32
    %c0_i32_0 = arith.constant 0 : i32
    %c0_i32_1 = arith.constant 0 : i32
    return %arg0, %c0_i32, %c0_i32_0 : i32, i32, i32
  }
}

</mosaic_0001>

<llo_original>
// kernel: scalogram_encoder_block.1
$region0: #{scalogram_encoder_block.1}
  #allocation0 [shape = 'u32[]', space=smem, size = 0x4, offset = 0x4, fixed_abs, tag = 'smem constant byte address 0x4 - core index']
  #allocation1 [shape = 'u32[72,128]{1,0:T(1,128)}', space=vmem, size = 0x9000, scoped, tag = 'internal scratch']
  %s0 = inlined_call_operand.vmem [shape: f32[4,8,256], index: 0, kind: input, shape index: {}]
  %s1 = inlined_call_operand.vmem [shape: f32[8,72], index: 1, kind: input, shape index: {}]
  %s2 = inlined_call_operand.vmem [shape: f32[8,1], index: 2, kind: input, shape index: {}]
  %s3 = inlined_call_operand.vmem [shape: f32[8,72], index: 3, kind: input, shape index: {}]
  %s4 = inlined_call_operand.vmem [shape: f32[8,1], index: 4, kind: input, shape index: {}]
  %s5 = inlined_call_operand.vmem [shape: f32[4,8,192], index: 5, kind: output, shape index: {}]
  %s6 = sld [smem:[#allocation0]]
  $region53: #{scalogram_encoder_block.1} parent=0
    _
  %s8 = ssub.s32 1, %s6
  %s9 = scalar_select 0, %s8, %s6
  loop: start=0, step=1, limit=4
  $region2: #{scalogram_encoder_block.1} parent=0 // loop_pre_header
    _
  $region3: #{scalogram_encoder_block.1} parent=0 // loop_header
    %s11 = sphi 0, %s15
    %p12 = scmp.ge.s32.totalorder %s11, 4
    %s21 = sphi 0, %s23
    %s24 = sphi 0, %s21
    %s25 = sphi 0, %s24
    %s41 = sphi 0, %s25
    %s45 = sphi 0, %s45
    %s47 = sphi 0, %s45
    %s48 = sphi 0, %s47
    %s62 = sphi 0, %s48
    %s66 = sphi 0, %s66
    %s68 = sphi 0, %s66
    %s69 = sphi 0, %s68
    %s83 = sphi 0, %s69
    %s87 = sphi 0, %s87
    %s89 = sphi 0, %s87
    %s90 = sphi 0, %s89
    %s104 = sphi 0, %s90
    %s108 = sphi 0, %s108
    %s110 = sphi 0, %s108
    %s111 = sphi 0, %s110
    %s125 = sphi 0, %s111
    %s131 = sphi 0, %s133
    %s134 = sphi 0, %s131
    %s135 = sphi 0, %s134
    %s151 = sphi 0, %s135
  $region4: #{scalogram_encoder_block.1} parent=0 // loop_header_branch
    %14 = sbr.rel (%p12) target = $region8
  $region5: #{scalogram_encoder_block.1} parent=0 // loop_body
    %s16 = ssub.s32 %s11, 1
    %s17 = ssub.s32 %s11, 2
    %s18 = sadd.s32 %s11, 1
    %s19 = ssub.s32 %s11, %s18
    %p20 = scmp.eq.s32.totalorder %s19, 0
    %s22 = sadd.s32 %s21, 1
    %s23 = scalar_select %p20, %s21, %s22
    %p26 = pneg %p20
    %p27 = scmp.eq.s32.totalorder %s11, 1
    %p28 = por %p26, %p27
    %p29 = scmp.ne.s32.totalorder %s21, %s24
    %p30 = scmp.eq.s32.totalorder %s11, 0
    %p31 = por %p29, %p30
    %p32 = scmp.ne.s32.totalorder %s21, %s24
    %p33 = scmp.eq.s32.totalorder %s16, 1
    %p34 = por %p32, %p33
    %p35 = scmp.ne.s32.totalorder %s24, %s25
    %p36 = scmp.eq.s32.totalorder %s16, 0
    %p37 = por %p35, %p36
    %p38 = scmp.ne.s32.totalorder %s24, %s25
    %p39 = scmp.eq.s32.totalorder %s17, 1
    %p40 = por %p38, %p39
    %p42 = scmp.ne.s32.totalorder %s25, %s41
    %p43 = scmp.eq.s32.totalorder %s17, 0
    %p44 = por %p42, %p43
    %s46 = sadd.s32 %s45, 1
    %p49 = scmp.eq.s32.totalorder %s11, 1
    %p50 = scmp.ne.s32.totalorder %s45, %s47
    %p51 = scmp.eq.s32.totalorder %s11, 0
    %p52 = por %p50, %p51
    %p53 = scmp.ne.s32.totalorder %s45, %s47
    %p54 = scmp.eq.s32.totalorder %s16, 1
    %p55 = por %p53, %p54
    %p56 = scmp.ne.s32.totalorder %s47, %s48
    %p57 = scmp.eq.s32.totalorder %s16, 0
    %p58 = por %p56, %p57
    %p59 = scmp.ne.s32.totalorder %s47, %s48
    %p60 = scmp.eq.s32.totalorder %s17, 1
    %p61 = por %p59, %p60
    %p63 = scmp.ne.s32.totalorder %s48, %s62
    %p64 = scmp.eq.s32.totalorder %s17, 0
    %p65 = por %p63, %p64
    %s67 = sadd.s32 %s66, 1
    %p70 = scmp.eq.s32.totalorder %s11, 1
    %p71 = scmp.ne.s32.totalorder %s66, %s68
    %p72 = scmp.eq.s32.totalorder %s11, 0
    %p73 = por %p71, %p72
    %p74 = scmp.ne.s32.totalorder %s66, %s68
    %p75 = scmp.eq.s32.totalorder %s16, 1
    %p76 = por %p74, %p75
    %p77 = scmp.ne.s32.totalorder %s68, %s69
    %p78 = scmp.eq.s32.totalorder %s16, 0
    %p79 = por %p77, %p78
    %p80 = scmp.ne.s32.totalorder %s68, %s69
    %p81 = scmp.eq.s32.totalorder %s17, 1
    %p82 = por %p80, %p81
    %p84 = scmp.ne.s32.totalorder %s69, %s83
    %p85 = scmp.eq.s32.totalorder %s17, 0
    %p86 = por %p84, %p85
    %s88 = sadd.s32 %s87, 1
    %p91 = scmp.eq.s32.totalorder %s11, 1
    %p92 = scmp.ne.s32.totalorder %s87, %s89
    %p93 = scmp.eq.s32.totalorder %s11, 0
    %p94 = por %p92, %p93
    %p95 = scmp.ne.s32.totalorder %s87, %s89
    %p96 = scmp.eq.s32.totalorder %s16, 1
    %p97 = por %p95, %p96
    %p98 = scmp.ne.s32.totalorder %s89, %s90
    %p99 = scmp.eq.s32.totalorder %s16, 0
    %p100 = por %p98, %p99
    %p101 = scmp.ne.s32.totalorder %s89, %s90
    %p102 = scmp.eq.s32.totalorder %s17, 1
    %p103 = por %p101, %p102
    %p105 = scmp.ne.s32.totalorder %s90, %s104
    %p106 = scmp.eq.s32.totalorder %s17, 0
    %p107 = por %p105, %p106
    %s109 = sadd.s32 %s108, 1
    %p112 = scmp.eq.s32.totalorder %s11, 1
    %p113 = scmp.ne.s32.totalorder %s108, %s110
    %p114 = scmp.eq.s32.totalorder %s11, 0
    %p115 = por %p113, %p114
    %p116 = scmp.ne.s32.totalorder %s108, %s110
    %p117 = scmp.eq.s32.totalorder %s16, 1
    %p118 = por %p116, %p117
    %p119 = scmp.ne.s32.totalorder %s110, %s111
    %p120 = scmp.eq.s32.totalorder %s16, 0
    %p121 = por %p119, %p120
    %p122 = scmp.ne.s32.totalorder %s110, %s111
    %p123 = scmp.eq.s32.totalorder %s17, 1
    %p124 = por %p122, %p123
    %p126 = scmp.ne.s32.totalorder %s111, %s125
    %p127 = scmp.eq.s32.totalorder %s17, 0
    %p128 = por %p126, %p127
    %s129 = ssub.s32 %s11, %s18
    %p130 = scmp.eq.s32.totalorder %s129, 0
    %s132 = sadd.s32 %s131, 1
    %s133 = scalar_select %p130, %s131, %s132
    %p136 = pneg %p130
    %p137 = scmp.eq.s32.totalorder %s11, 1
    %p138 = por %p136, %p137
    %p139 = scmp.ne.s32.totalorder %s131, %s134
    %p140 = scmp.eq.s32.totalorder %s11, 0
    %p141 = por %p139, %p140
    %p142 = scmp.ne.s32.totalorder %s131, %s134
    %p143 = scmp.eq.s32.totalorder %s16, 1
    %p144 = por %p142, %p143
    %p145 = scmp.ne.s32.totalorder %s134, %s135
    %p146 = scmp.eq.s32.totalorder %s16, 0
    %p147 = por %p145, %p146
    %p148 = scmp.ne.s32.totalorder %s134, %s135
    %p149 = scmp.eq.s32.totalorder %s17, 1
    %p150 = por %p148, %p149
    %p152 = scmp.ne.s32.totalorder %s135, %s151
    %p153 = scmp.eq.s32.totalorder %s17, 0
    %p154 = por %p152, %p153
    %p155 = scmp.le.s32.totalorder 1, %s11
    %p156 = scmp.lt.s32.totalorder %s11, 3
    %p157 = pnand %p155, %p156
    %p158 = pneg %p157
    // Predicated region
    $region9: #{scalogram_encoder_block.1} parent=5 // pred_check
      _
    $region10: #{scalogram_encoder_block.1} parent=5 // pred_check_branch
      %160 = sbr.rel (%p157) target = $region12
    $region11: #{scalogram_encoder_block.1} parent=5 // pred_region
      %s161 = ssub.s32 %s11, 1
      // Predicated region
      $region13: #{scalogram_encoder_block.1} parent=11 // pred_check
        %p162 = pneg %p58
      $region14: #{scalogram_encoder_block.1} parent=11 // pred_check_branch
        %164 = sbr.rel (%p162) target = $region16
      $region15: #{scalogram_encoder_block.1} parent=11 // pred_region
        _
      $region16: #{scalogram_encoder_block.1} parent=11 // pred_fallthru
        _
      // Predicated region
      $region17: #{scalogram_encoder_block.1} parent=11 // pred_check
        %p165 = pneg %p79
      $region18: #{scalogram_encoder_block.1} parent=11 // pred_check_branch
        %167 = sbr.rel (%p165) target = $region20
      $region19: #{scalogram_encoder_block.1} parent=11 // pred_region
        _
      $region20: #{scalogram_encoder_block.1} parent=11 // pred_fallthru
        _
      // Predicated region
      $region21: #{scalogram_encoder_block.1} parent=11 // pred_check
        %p168 = pneg %p100
      $region22: #{scalogram_encoder_block.1} parent=11 // pred_check_branch
        %170 = sbr.rel (%p168) target = $region24
      $region23: #{scalogram_encoder_block.1} parent=11 // pred_region
        _
      $region24: #{scalogram_encoder_block.1} parent=11 // pred_fallthru
        _
      // Predicated region
      $region25: #{scalogram_encoder_block.1} parent=11 // pred_check
        %p171 = pneg %p121
      $region26: #{scalogram_encoder_block.1} parent=11 // pred_check_branch
        %173 = sbr.rel (%p171) target = $region28
      $region27: #{scalogram_encoder_block.1} parent=11 // pred_region
        _
      $region28: #{scalogram_encoder_block.1} parent=11 // pred_fallthru
        _
    $region12: #{scalogram_encoder_block.1} parent=5 // pred_fallthru
      _
    %p174 = scmp.lt.s32.totalorder %s11, 2
    // Predicated region
    $region29: #{scalogram_encoder_block.1} parent=5 // pred_check
      %p175 = pneg %p174
    $region30: #{scalogram_encoder_block.1} parent=5 // pred_check_branch
      %177 = sbr.rel (%p175) target = $region32
    $region31: #{scalogram_encoder_block.1} parent=5 // pred_region
      // Predicated region
      $region33: #{scalogram_encoder_block.1} parent=31 // pred_check
        %p178 = pneg %p31
      $region34: #{scalogram_encoder_block.1} parent=31 // pred_check_branch
        %180 = sbr.rel (%p178) target = $region36
      $region35: #{scalogram_encoder_block.1} parent=31 // pred_region
        %s181 = smul.u32 2, %s11
        %p182 = scmp.lt.s32.totalorder %s181, 3
        %s183 = scalar_select %p182, %s181, 3
        %s184 = smul.addr %s183, 2
        %s185 = smul.addr %s184, 8
        %s186 = scalar_lea.vmem %s0, %s185
        %s187 = smul.u32 2, %s11
      $region36: #{scalogram_encoder_block.1} parent=31 // pred_fallthru
        _
    $region32: #{scalogram_encoder_block.1} parent=5 // pred_fallthru
      _
    %p188 = scmp.le.s32.totalorder 1, %s11
    %p189 = scmp.lt.s32.totalorder %s11, 3
    %p190 = pnand %p188, %p189
    %p191 = pneg %p190
    // Predicated region
    $region37: #{scalogram_encoder_block.1} parent=5 // pred_check
      _
    $region38: #{scalogram_encoder_block.1} parent=5 // pred_check_branch
      %193 = sbr.rel (%p190) target = $region40
    $region39: #{scalogram_encoder_block.1} parent=5 // pred_region
      %s194 = ssub.s32 %s11, 1
      %s195 = smul.u32 2, %s16
      %p196 = scmp.lt.s32.totalorder %s195, 3
      %s197 = scalar_select %p196, %s195, 3
      %s198 = smul.addr %s197, 2
      %s199 = smul.addr %s198, 8
      %s200 = scalar_lea.vmem %s0, %s199
      %p201 = pneg %p37
      %p202 = pneg %p34
      %p203 = pneg %p58
      %p204 = pneg %p55
      %p205 = pneg %p79
      %p206 = pneg %p76
      %p207 = pneg %p100
      %p208 = pneg %p97
      %p209 = pneg %p121
      %p210 = pneg %p118
      %p211 = pneg %p147
      %p212 = pneg %p144
      %s213 = smul.u32 2, %s16
      %p214 = scmp.lt.s32.totalorder %s213, 3
      %s215 = scalar_select %p214, %s213, 3
      %s216 = smul.addr %s215, 2
      %s217 = smul.addr %s216, 8
      %s218 = scalar_lea.vmem %s5, %s217
      %s219 = smul.u32 2, %s16
      %p220 = scmp.lt.s32.totalorder %s219, 3
      %s221 = scalar_select %p220, %s219, 3
      %s222 = smul.addr %s221, 2
      %s223 = smul.addr %s222, 8
      %s224 = scalar_lea.vmem %s0, %s223
      %s225 = smul.u32 2, %s16
      %s226 = smul.u32 2, %s16
      %p227 = scmp.lt.s32.totalorder %s226, 3
      %s228 = scalar_select %p227, %s226, 3
      %s229 = smul.addr %s228, 2
      %s230 = smul.addr %s229, 8
      %s231 = scalar_lea.vmem %s5, %s230
      %s232 = smul.u32 2, %s16
      %v233 = vld [vmem:[%s1] sm:$0xff]
      %v234 = vld [vmem:[%s3] sm:$0xff]
      %v235 = vld [vmem:[%s2] sm:$0xff]
      %v236 = vld [vmem:[%s4] sm:$0xff]
      %v237 = vld [vmem:[%s224] sm:$0xff]
      %v238 = vld [vmem:[%s224 + $0x8] sm:$0xff]
      %s239 = scalar_lea.vmem %s224, 16
      %v240 = vld [vmem:[%s239] sm:$0xff]
      %v241 = vld [vmem:[%s239 + $0x8] sm:$0xff]
      %242 = vrot.lane.b32.xlu0 %v237, 127
      %v243 = vpop.permute.xlu0 %242
      %244 = vrot.lane.b32.xlu0 %v238, 127
      %v245 = vpop.permute.xlu0 %244
      %246 = vrot.lane.b32.xlu0 %v240, 127
      %v247 = vpop.permute.xlu0 %246
      %248 = vrot.lane.b32.xlu0 %v241, 127
      %v249 = vpop.permute.xlu0 %248
      %v250 = vlaneseq
      %v251 = vand.u32 %v250, 127
      %vm252 = vcmp.lt.s32.totalorder %v251, 127
      %v253 = vsel %vm252, %v247, %v249
      %v254 = vsel %vm252, %v245, %v247
      %v255 = vsel %vm252, %v243, %v245
      %v256 = vsel %vm252, %v249, %v243
      %257 = vrot.lane.b32.xlu0 %v237, 126
      %v258 = vpop.permute.xlu0 %257
      %259 = vrot.lane.b32.xlu0 %v238, 126
      %v260 = vpop.permute.xlu0 %259
      %261 = vrot.lane.b32.xlu0 %v240, 126
      %v262 = vpop.permute.xlu0 %261
      %263 = vrot.lane.b32.xlu0 %v241, 126
      %v264 = vpop.permute.xlu0 %263
      %vm265 = vcmp.lt.s32.totalorder %v251, 126
      %v266 = vsel %vm265, %v262, %v264
      %v267 = vsel %vm265, %v260, %v262
      %v268 = vsel %vm265, %v258, %v260
      %v269 = vsel %vm265, %v264, %v258
      %270 = vrot.lane.b32.xlu0 %v237, 112
      %v271 = vpop.permute.xlu0 %270
      %272 = vrot.lane.b32.xlu0 %v238, 112
      %v273 = vpop.permute.xlu0 %272
      %274 = vrot.lane.b32.xlu0 %v240, 112
      %v275 = vpop.permute.xlu0 %274
      %276 = vrot.lane.b32.xlu0 %v241, 112
      %v277 = vpop.permute.xlu0 %276
      %vm278 = vcmp.lt.s32.totalorder %v251, 112
      %v279 = vsel %vm278, %v275, %v277
      %v280 = vsel %vm278, %v273, %v275
      %v281 = vsel %vm278, %v271, %v273
      %v282 = vsel %vm278, %v277, %v271
      %283 = vrot.lane.b32.xlu0 %v237, 111
      %v284 = vpop.permute.xlu0 %283
      %285 = vrot.lane.b32.xlu0 %v238, 111
      %v286 = vpop.permute.xlu0 %285
      %287 = vrot.lane.b32.xlu0 %v240, 111
      %v288 = vpop.permute.xlu0 %287
      %289 = vrot.lane.b32.xlu0 %v241, 111
      %v290 = vpop.permute.xlu0 %289
      %vm291 = vcmp.lt.s32.totalorder %v251, 111
      %v292 = vsel %vm291, %v288, %v290
      %v293 = vsel %vm291, %v286, %v288
      %v294 = vsel %vm291, %v284, %v286
      %v295 = vsel %vm291, %v290, %v284
      %296 = vrot.lane.b32.xlu0 %v237, 110
      %v297 = vpop.permute.xlu0 %296
      %298 = vrot.lane.b32.xlu0 %v238, 110
      %v299 = vpop.permute.xlu0 %298
      %300 = vrot.lane.b32.xlu0 %v240, 110
      %v301 = vpop.permute.xlu0 %300
      %302 = vrot.lane.b32.xlu0 %v241, 110
      %v303 = vpop.permute.xlu0 %302
      %vm304 = vcmp.lt.s32.totalorder %v251, 110
      %v305 = vsel %vm304, %v301, %v303
      %v306 = vsel %vm304, %v299, %v301
      %v307 = vsel %vm304, %v297, %v299
      %v308 = vsel %vm304, %v303, %v297
      %309 = vrot.lane.b32.xlu0 %v237, 96
      %v310 = vpop.permute.xlu0 %309
      %311 = vrot.lane.b32.xlu0 %v238, 96
      %v312 = vpop.permute.xlu0 %311
      %313 = vrot.lane.b32.xlu0 %v240, 96
      %v314 = vpop.permute.xlu0 %313
      %315 = vrot.lane.b32.xlu0 %v241, 96
      %v316 = vpop.permute.xlu0 %315
      %vm317 = vcmp.lt.s32.totalorder %v251, 96
      %v318 = vsel %vm317, %v314, %v316
      %v319 = vsel %vm317, %v312, %v314
      %v320 = vsel %vm317, %v310, %v312
      %v321 = vsel %vm317, %v316, %v310
      %322 = vrot.lane.b32.xlu0 %v237, 95
      %v323 = vpop.permute.xlu0 %322
      %324 = vrot.lane.b32.xlu0 %v238, 95
      %v325 = vpop.permute.xlu0 %324
      %326 = vrot.lane.b32.xlu0 %v240, 95
      %v327 = vpop.permute.xlu0 %326
      %328 = vrot.lane.b32.xlu0 %v241, 95
      %v329 = vpop.permute.xlu0 %328
      %vm330 = vcmp.lt.s32.totalorder %v251, 95
      %v331 = vsel %vm330, %v327, %v329
      %v332 = vsel %vm330, %v325, %v327
      %v333 = vsel %vm330, %v323, %v325
      %v334 = vsel %vm330, %v329, %v323
      %335 = vrot.lane.b32.xlu0 %v237, 94
      %v336 = vpop.permute.xlu0 %335
      %337 = vrot.lane.b32.xlu0 %v238, 94
      %v338 = vpop.permute.xlu0 %337
      %339 = vrot.lane.b32.xlu0 %v240, 94
      %v340 = vpop.permute.xlu0 %339
      %341 = vrot.lane.b32.xlu0 %v241, 94
      %v342 = vpop.permute.xlu0 %341
      %vm343 = vcmp.lt.s32.totalorder %v251, 94
      %v344 = vsel %vm343, %v340, %v342
      %v345 = vsel %vm343, %v338, %v340
      %v346 = vsel %vm343, %v336, %v338
      %v347 = vsel %vm343, %v342, %v336
      %349 = vset.pattern.permute.xlu0 0
      %350 = vperm.xlu0 %349, %v235
      %v351 = vpop.permute.xlu0 %350
      %vm353 = vcmask 588800
      %v355 = vsel %vm353, %v233, 0
      %357 = vmatpush.msra.mxu0 0.0
      %358 = vmatpush.msra.mxu0 0.0
      %359 = vmatpush.msra.mxu0 0.0
      %360 = vmatpush.msra.mxu0 0.0
      %361 = vmatpush.msra.mxu0 0.0
      %362 = vmatpush.msra.mxu0 0.0
      %363 = vmatpush.msra.mxu0 0.0
      %364 = vmatpush.msra.mxu0 %v346
      %365 = vmatpush.msra.mxu0 %v333
      %366 = vmatpush.msra.mxu0 %v320
      %367 = vmatpush.msra.mxu0 %v307
      %368 = vmatpush.msra.mxu0 %v294
      %369 = vmatpush.msra.mxu0 %v281
      %370 = vmatpush.msra.mxu0 %v268
      %371 = vmatpush.msra.mxu0 %v255
      %372 = vmatpush.msra.mxu0 %v237
      %373 = vmatmul.f32.gmra.mxu0 %v355
      %v374 = vpop.f32.mrf.mxu0
      %v375 = vadd.f32 %v351, %v374
      %376 = vdwg.mxu0
      %377 = vmatpush.msra.mxu0 0.0
      %378 = vmatpush.msra.mxu0 0.0
      %379 = vmatpush.msra.mxu0 0.0
      %380 = vmatpush.msra.mxu0 0.0
      %381 = vmatpush.msra.mxu0 0.0
      %382 = vmatpush.msra.mxu0 0.0
      %383 = vmatpush.msra.mxu0 0.0
      %384 = vmatpush.msra.mxu0 %v345
      %385 = vmatpush.msra.mxu0 %v332
      %386 = vmatpush.msra.mxu0 %v319
      %387 = vmatpush.msra.mxu0 %v306
      %388 = vmatpush.msra.mxu0 %v293
      %389 = vmatpush.msra.mxu0 %v280
      %390 = vmatpush.msra.mxu0 %v267
      %391 = vmatpush.msra.mxu0 %v254
      %392 = vmatpush.msra.mxu0 %v238
      %393 = vmatmul.f32.gmra.mxu0 %v355
      %v394 = vpop.f32.mrf.mxu0
      %v395 = vadd.f32 %v351, %v394
      %396 = vdwg.mxu0
      %397 = vmatpush.msra.mxu0 0.0
      %398 = vmatpush.msra.mxu0 0.0
      %399 = vmatpush.msra.mxu0 0.0
      %400 = vmatpush.msra.mxu0 0.0
      %401 = vmatpush.msra.mxu0 0.0
      %402 = vmatpush.msra.mxu0 0.0
      %403 = vmatpush.msra.mxu0 0.0
      %404 = vmatpush.msra.mxu0 %v344
      %405 = vmatpush.msra.mxu0 %v331
      %406 = vmatpush.msra.mxu0 %v318
      %407 = vmatpush.msra.mxu0 %v305
      %408 = vmatpush.msra.mxu0 %v292
      %409 = vmatpush.msra.mxu0 %v279
      %410 = vmatpush.msra.mxu0 %v266
      %411 = vmatpush.msra.mxu0 %v253
      %412 = vmatpush.msra.mxu0 %v240
      %413 = vmatmul.f32.gmra.mxu0 %v355
      %v414 = vpop.f32.mrf.mxu0
      %v415 = vadd.f32 %v351, %v414
      %416 = vdwg.mxu0
      %417 = vmatpush.msra.mxu0 0.0
      %418 = vmatpush.msra.mxu0 0.0
      %419 = vmatpush.msra.mxu0 0.0
      %420 = vmatpush.msra.mxu0 0.0
      %421 = vmatpush.msra.mxu0 0.0
      %422 = vmatpush.msra.mxu0 0.0
      %423 = vmatpush.msra.mxu0 0.0
      %424 = vmatpush.msra.mxu0 %v347
      %425 = vmatpush.msra.mxu0 %v334
      %426 = vmatpush.msra.mxu0 %v321
      %427 = vmatpush.msra.mxu0 %v308
      %428 = vmatpush.msra.mxu0 %v295
      %429 = vmatpush.msra.mxu0 %v282
      %430 = vmatpush.msra.mxu0 %v269
      %431 = vmatpush.msra.mxu0 %v256
      %432 = vmatpush.msra.mxu0 %v241
      %433 = vmatmul.f32.gmra.mxu0 %v355
      %v434 = vpop.f32.mrf.mxu0
      %v435 = vadd.f32 %v351, %v434
      %436 = vdwg.mxu0
      %v437 = vmax.f32 %v375, 0.0
      %v438 = vmax.f32 %v395, 0.0
      %v439 = vmax.f32 %v415, 0.0
      %v440 = vmax.f32 %v435, 0.0
      %441 = vrot.lane.b32.xlu0 %v437, 127
      %v442 = vpop.permute.xlu0 %441
      %443 = vrot.lane.b32.xlu0 %v438, 127
      %v444 = vpop.permute.xlu0 %443
      %445 = vrot.lane.b32.xlu0 %v439, 127
      %v446 = vpop.permute.xlu0 %445
      %447 = vrot.lane.b32.xlu0 %v440, 127
      %v448 = vpop.permute.xlu0 %447
      %v449 = vsel %vm252, %v446, %v448
      %v450 = vsel %vm252, %v444, %v446
      %v451 = vsel %vm252, %v442, %v444
      %v452 = vsel %vm252, %v448, %v442
      %453 = vrot.lane.b32.xlu0 %v437, 126
      %v454 = vpop.permute.xlu0 %453
      %455 = vrot.lane.b32.xlu0 %v438, 126
      %v456 = vpop.permute.xlu0 %455
      %457 = vrot.lane.b32.xlu0 %v439, 126
      %v458 = vpop.permute.xlu0 %457
      %459 = vrot.lane.b32.xlu0 %v440, 126
      %v460 = vpop.permute.xlu0 %459
      %v461 = vsel %vm265, %v458, %v460
      %v462 = vsel %vm265, %v456, %v458
      %v463 = vsel %vm265, %v454, %v456
      %v464 = vsel %vm265, %v460, %v454
      %465 = vrot.lane.b32.xlu0 %v437, 112
      %v466 = vpop.permute.xlu0 %465
      %467 = vrot.lane.b32.xlu0 %v438, 112
      %v468 = vpop.permute.xlu0 %467
      %469 = vrot.lane.b32.xlu0 %v439, 112
      %v470 = vpop.permute.xlu0 %469
      %471 = vrot.lane.b32.xlu0 %v440, 112
      %v472 = vpop.permute.xlu0 %471
      %v473 = vsel %vm278, %v470, %v472
      %v474 = vsel %vm278, %v468, %v470
      %v475 = vsel %vm278, %v466, %v468
      %v476 = vsel %vm278, %v472, %v466
      %477 = vrot.lane.b32.xlu0 %v437, 111
      %v478 = vpop.permute.xlu0 %477
      %479 = vrot.lane.b32.xlu0 %v438, 111
      %v480 = vpop.permute.xlu0 %479
      %481 = vrot.lane.b32.xlu0 %v439, 111
      %v482 = vpop.permute.xlu0 %481
      %483 = vrot.lane.b32.xlu0 %v440, 111
      %v484 = vpop.permute.xlu0 %483
      %v485 = vsel %vm291, %v482, %v484
      %v486 = vsel %vm291, %v480, %v482
      %v487 = vsel %vm291, %v478, %v480
      %v488 = vsel %vm291, %v484, %v478
      %489 = vrot.lane.b32.xlu0 %v437, 110
      %v490 = vpop.permute.xlu0 %489
      %491 = vrot.lane.b32.xlu0 %v438, 110
      %v492 = vpop.permute.xlu0 %491
      %493 = vrot.lane.b32.xlu0 %v439, 110
      %v494 = vpop.permute.xlu0 %493
      %495 = vrot.lane.b32.xlu0 %v440, 110
      %v496 = vpop.permute.xlu0 %495
      %v497 = vsel %vm304, %v494, %v496
      %v498 = vsel %vm304, %v492, %v494
      %v499 = vsel %vm304, %v490, %v492
      %v500 = vsel %vm304, %v496, %v490
      %501 = vrot.lane.b32.xlu0 %v437, 96
      %v502 = vpop.permute.xlu0 %501
      %503 = vrot.lane.b32.xlu0 %v438, 96
      %v504 = vpop.permute.xlu0 %503
      %505 = vrot.lane.b32.xlu0 %v439, 96
      %v506 = vpop.permute.xlu0 %505
      %507 = vrot.lane.b32.xlu0 %v440, 96
      %v508 = vpop.permute.xlu0 %507
      %v509 = vsel %vm317, %v506, %v508
      %v510 = vsel %vm317, %v504, %v506
      %v511 = vsel %vm317, %v502, %v504
      %v512 = vsel %vm317, %v508, %v502
      %513 = vrot.lane.b32.xlu0 %v437, 95
      %v514 = vpop.permute.xlu0 %513
      %515 = vrot.lane.b32.xlu0 %v438, 95
      %v516 = vpop.permute.xlu0 %515
      %517 = vrot.lane.b32.xlu0 %v439, 95
      %v518 = vpop.permute.xlu0 %517
      %519 = vrot.lane.b32.xlu0 %v440, 95
      %v520 = vpop.permute.xlu0 %519
      %v521 = vsel %vm330, %v518, %v520
      %v522 = vsel %vm330, %v516, %v518
      %v523 = vsel %vm330, %v514, %v516
      %v524 = vsel %vm330, %v520, %v514
      %525 = vrot.lane.b32.xlu0 %v437, 94
      %v526 = vpop.permute.xlu0 %525
      %527 = vrot.lane.b32.xlu0 %v438, 94
      %v528 = vpop.permute.xlu0 %527
      %529 = vrot.lane.b32.xlu0 %v439, 94
      %v530 = vpop.permute.xlu0 %529
      %531 = vrot.lane.b32.xlu0 %v440, 94
      %v532 = vpop.permute.xlu0 %531
      %v533 = vsel %vm343, %v530, %v532
      %v534 = vsel %vm343, %v528, %v530
      %v535 = vsel %vm343, %v526, %v528
      %v536 = vsel %vm343, %v532, %v526
      %538 = vset.pattern.permute.xlu0 0
      %539 = vperm.xlu0 %538, %v236
      %v540 = vpop.permute.xlu0 %539
      %v543 = vsel %vm353, %v234, 0
      %545 = vmatpush.msra.mxu0 0.0
      %546 = vmatpush.msra.mxu0 0.0
      %547 = vmatpush.msra.mxu0 0.0
      %548 = vmatpush.msra.mxu0 0.0
      %549 = vmatpush.msra.mxu0 0.0
      %550 = vmatpush.msra.mxu0 0.0
      %551 = vmatpush.msra.mxu0 0.0
      %552 = vmatpush.msra.mxu0 %v535
      %553 = vmatpush.msra.mxu0 %v523
      %554 = vmatpush.msra.mxu0 %v511
      %555 = vmatpush.msra.mxu0 %v499
      %556 = vmatpush.msra.mxu0 %v487
      %557 = vmatpush.msra.mxu0 %v475
      %558 = vmatpush.msra.mxu0 %v463
      %559 = vmatpush.msra.mxu0 %v451
      %560 = vmatpush.msra.mxu0 %v437
      %561 = vmatmul.f32.gmra.mxu0 %v543
      %v562 = vpop.f32.mrf.mxu0
      %v563 = vadd.f32 %v540, %v562
      %564 = vdwg.mxu0
      %565 = vmatpush.msra.mxu0 0.0
      %566 = vmatpush.msra.mxu0 0.0
      %567 = vmatpush.msra.mxu0 0.0
      %568 = vmatpush.msra.mxu0 0.0
      %569 = vmatpush.msra.mxu0 0.0
      %570 = vmatpush.msra.mxu0 0.0
      %571 = vmatpush.msra.mxu0 0.0
      %572 = vmatpush.msra.mxu0 %v534
      %573 = vmatpush.msra.mxu0 %v522
      %574 = vmatpush.msra.mxu0 %v510
      %575 = vmatpush.msra.mxu0 %v498
      %576 = vmatpush.msra.mxu0 %v486
      %577 = vmatpush.msra.mxu0 %v474
      %578 = vmatpush.msra.mxu0 %v462
      %579 = vmatpush.msra.mxu0 %v450
      %580 = vmatpush.msra.mxu0 %v438
      %581 = vmatmul.f32.gmra.mxu0 %v543
      %v582 = vpop.f32.mrf.mxu0
      %v583 = vadd.f32 %v540, %v582
      %584 = vdwg.mxu0
      %585 = vmatpush.msra.mxu0 0.0
      %586 = vmatpush.msra.mxu0 0.0
      %587 = vmatpush.msra.mxu0 0.0
      %588 = vmatpush.msra.mxu0 0.0
      %589 = vmatpush.msra.mxu0 0.0
      %590 = vmatpush.msra.mxu0 0.0
      %591 = vmatpush.msra.mxu0 0.0
      %592 = vmatpush.msra.mxu0 %v533
      %593 = vmatpush.msra.mxu0 %v521
      %594 = vmatpush.msra.mxu0 %v509
      %595 = vmatpush.msra.mxu0 %v497
      %596 = vmatpush.msra.mxu0 %v485
      %597 = vmatpush.msra.mxu0 %v473
      %598 = vmatpush.msra.mxu0 %v461
      %599 = vmatpush.msra.mxu0 %v449
      %600 = vmatpush.msra.mxu0 %v439
      %601 = vmatmul.f32.gmra.mxu0 %v543
      %v602 = vpop.f32.mrf.mxu0
      %v603 = vadd.f32 %v540, %v602
      %604 = vdwg.mxu0
      %605 = vmatpush.msra.mxu0 0.0
      %606 = vmatpush.msra.mxu0 0.0
      %607 = vmatpush.msra.mxu0 0.0
      %608 = vmatpush.msra.mxu0 0.0
      %609 = vmatpush.msra.mxu0 0.0
      %610 = vmatpush.msra.mxu0 0.0
      %611 = vmatpush.msra.mxu0 0.0
      %612 = vmatpush.msra.mxu0 %v536
      %613 = vmatpush.msra.mxu0 %v524
      %614 = vmatpush.msra.mxu0 %v512
      %615 = vmatpush.msra.mxu0 %v500
      %616 = vmatpush.msra.mxu0 %v488
      %617 = vmatpush.msra.mxu0 %v476
      %618 = vmatpush.msra.mxu0 %v464
      %619 = vmatpush.msra.mxu0 %v452
      %620 = vmatpush.msra.mxu0 %v440
      %621 = vmatmul.f32.gmra.mxu0 %v543
      %v622 = vpop.f32.mrf.mxu0
      %v623 = vadd.f32 %v540, %v622
      %624 = vdwg.mxu0
      %v625 = vmax.f32 %v563, 0.0
      %v626 = vmax.f32 %v583, 0.0
      %v627 = vmax.f32 %v603, 0.0
      %v628 = vmax.f32 %v623, 0.0
      %631 = vrot.lane.b32.xlu0 %v237, 94
      %v632 = vpop.permute.xlu0 %631
      %633 = vrot.lane.b32.xlu0 %v238, 94
      %v634 = vpop.permute.xlu0 %633
      %vm635 = vcmask 769024
      %v636 = vsel %vm635, %v632, %v634
      %v639 = vadd.f32 %v625, %v636
      %v640 = vadd.f32 %v626, %v634
      %641 = vst [vmem:[%s231] sm:$0xff] %v639
      %vm642 = vcmask 523264
      %643 = vst.msk [vmem:[%s231 + $0x8] sm:$0xff] %vm642, %v640
      %646 = vrot.lane.b32.xlu0 %v240, 94
      %v647 = vpop.permute.xlu0 %646
      %648 = vrot.lane.b32.xlu0 %v241, 94
      %v649 = vpop.permute.xlu0 %648
      %v650 = vsel %vm635, %v647, %v649
      %v653 = vadd.f32 %v627, %v650
      %v654 = vadd.f32 %v628, %v649
      %s655 = scalar_lea.vmem %s231, 16
      %656 = vst [vmem:[%s655] sm:$0xff] %v653
      %657 = vst.msk [vmem:[%s655 + $0x8] sm:$0xff] %vm642, %v654
      %s658 = smul.u32 2, %s16
      %p659 = scmp.lt.s32.totalorder %s658, 3
      %s660 = scalar_select %p659, %s658, 3
      %s661 = smul.addr %s660, 2
      %s662 = smul.addr %s661, 8
      %s663 = scalar_lea.vmem %s5, %s662
      // Predicated region
      $region41: #{scalogram_encoder_block.1} parent=39 // pred_check
        %p664 = pneg %p144
      $region42: #{scalogram_encoder_block.1} parent=39 // pred_check_branch
        %666 = sbr.rel (%p664) target = $region44
      $region43: #{scalogram_encoder_block.1} parent=39 // pred_region
        %s667 = smul.u32 2, %s16
      $region44: #{scalogram_encoder_block.1} parent=39 // pred_fallthru
        _
    $region40: #{scalogram_encoder_block.1} parent=5 // pred_fallthru
      _
    %p668 = scmp.le.s32.totalorder 2, %s11
    // Predicated region
    $region45: #{scalogram_encoder_block.1} parent=5 // pred_check
      %p669 = pneg %p668
    $region46: #{scalogram_encoder_block.1} parent=5 // pred_check_branch
      %671 = sbr.rel (%p669) target = $region48
    $region47: #{scalogram_encoder_block.1} parent=5 // pred_region
      %s672 = ssub.s32 %s11, 2
      // Predicated region
      $region49: #{scalogram_encoder_block.1} parent=47 // pred_check
        %p673 = pneg %p150
      $region50: #{scalogram_encoder_block.1} parent=47 // pred_check_branch
        %675 = sbr.rel (%p673) target = $region52
      $region51: #{scalogram_encoder_block.1} parent=47 // pred_region
        %s676 = smul.u32 2, %s17
        %p677 = scmp.lt.s32.totalorder %s676, 3
        %s678 = scalar_select %p677, %s676, 3
        %s679 = smul.addr %s678, 2
        %s680 = smul.addr %s679, 8
        %s681 = scalar_lea.vmem %s5, %s680
      $region52: #{scalogram_encoder_block.1} parent=47 // pred_fallthru
        _
    $region48: #{scalogram_encoder_block.1} parent=5 // pred_fallthru
      _
  $region6: #{scalogram_encoder_block.1} parent=0 // loop_footer
    %s15 = sadd.s32 1, %s11
  $region7: #{scalogram_encoder_block.1} parent=0 // loop_footer_branch
    %10 = sbr.rel target = $region3
  $region8: #{scalogram_encoder_block.1} parent=0 // loop_exit
    _

</llo_original>
